<compile_context>
chip_gen: v7x
topology: tpu7x:2x2x1
jax: 0.10.0
libtpu: 0.0.40
codegen_flags: <defaults>
</compile_context>

<pallas_src>
import functools

import jax
import jax.numpy as jnp
from jax.experimental import pallas as pl
from jax.experimental.pallas import tpu as pltpu

EPS = 1e-5  # torch.nn.LayerNorm default


# ---------------------------------------------------------------------------
# Kernel bodies
# ---------------------------------------------------------------------------
def _ln_relu_epilogue(y, b_ref, g_ref, beta_ref, o_ref, inv_n):
    """bias + LayerNorm over the (zero-padded) channel dim + ReLU, all in f32.

    Channel dim is padded to a lane multiple of 128 with zero weight columns /
    zero bias, so padded lanes of `y` are exactly 0 and contribute nothing to
    sum(y) / sum(y*y); dividing by the *real* channel count gives exact stats.
    gamma/beta are zero-padded, so padded output lanes come out as relu(0)=0.
    """
    y = y + b_ref[...]                                      # (tm,Np)+(1,Np)
    s1 = jnp.sum(y, axis=-1, keepdims=True)                 # one XLU pass
    s2 = jnp.sum(y * y, axis=-1, keepdims=True)             # one XLU pass
    mean = s1 * inv_n
    var = jnp.maximum(s2 * inv_n - mean * mean, 0.0)        # biased var (torch)
    scale = jax.lax.rsqrt(var + EPS) * g_ref[...]           # gamma fused into 1/sigma
    o_ref[...] = jnp.maximum((y - mean) * scale + beta_ref[...], 0.0).astype(o_ref.dtype)


def _fused_kernel(x_ref, w_ref, b_ref, g_ref, beta_ref, o_ref, *, inv_n):
    """Full-K-resident path: one MXU matmul + fused epilogue."""
    y = jnp.dot(x_ref[...], w_ref[...], preferred_element_type=jnp.float32)
    _ln_relu_epilogue(y, b_ref, g_ref, beta_ref, o_ref, inv_n)


def _fused_kernel_ktiled_inplace(x_ref, w_ref, b_ref, g_ref, beta_ref, o_ref, *, inv_n):
    """K-tiled, f32 output: accumulate directly into the resident out block."""
    k = pl.program_id(1)

    @pl.when(k == 0)
    def _():
        o_ref[...] = jnp.zeros_like(o_ref)

    o_ref[...] += jnp.dot(x_ref[...], w_ref[...], preferred_element_type=jnp.float32)

    @pl.when(k == pl.num_programs(1) - 1)
    def _():
        _ln_relu_epilogue(o_ref[...], b_ref, g_ref, beta_ref, o_ref, inv_n)


def _fused_kernel_ktiled_acc(x_ref, w_ref, b_ref, g_ref, beta_ref, o_ref, acc_ref, *, inv_n):
    """K-tiled, non-f32 output: f32 VMEM accumulator scratch."""
    k = pl.program_id(1)

    @pl.when(k == 0)
    def _():
        acc_ref[...] = jnp.zeros_like(acc_ref)

    acc_ref[...] += jnp.dot(x_ref[...], w_ref[...], preferred_element_type=jnp.float32)

    @pl.when(k == pl.num_programs(1) - 1)
    def _():
        _ln_relu_epilogue(acc_ref[...], b_ref, g_ref, beta_ref, o_ref, inv_n)


# ---------------------------------------------------------------------------
# Tiling / VMEM budgeting helpers
# ---------------------------------------------------------------------------
def _round_up(x, m):
    return ((x + m - 1) // m) * m


def _round_down(x, m):
    return max((x // m) * m, m)


def _tpu_vmem_capacity_bytes():
    try:
        return int(pltpu.get_tpu_info().vmem_capacity_bytes)
    except Exception:                      # conservative fallback (v5e/v6e size)
        return 128 << 20


def _vmem_estimate(tm, tk, n_pad, n_k, itemsize, out_itemsize, use_acc):
    w_bufs = 1 if n_k == 1 else 2          # invariant weight -> single buffer
    x_tile = 2 * tm * tk * itemsize        # double-buffered activation rows
    w_tile = w_bufs * tk * n_pad * itemsize
    params = 3 * n_pad * 4                 # bias / gamma / beta (single buffer)
    out_tile = 2 * tm * n_pad * out_itemsize
    acc = tm * n_pad * 4 if use_acc else 0
    return x_tile + w_tile + params + out_tile + acc


def _choose_tiles(M, K, n_pad, itemsize, out_itemsize, budget, tm_align,
                  resident, tm_max=512):
    tm = max(tm_align, min(tm_max, _round_up(M, tm_align)))
    if resident:
        tk = K
        while tm > tm_align and _vmem_estimate(tm, tk, n_pad, 1, itemsize,
                                               out_itemsize, False) > budget:
            tm //= 2
        return _round_down(tm, tm_align), tk
    # K-tiled path: the weight blocks re-stream from HBM once per row tile, so
    # keep tm large (>= 256, the MXU systolic dim on v6e/v7x) and shrink tk first.
    tk = min(512, _round_up(K, 128))
    use_acc = out_itemsize != 4
    while _vmem_estimate(tm, tk, n_pad, 2, itemsize, out_itemsize, use_acc) > budget:
        if tk > 256:
            tk //= 2
        elif tm > 256:
            tm //= 2
        elif tk > 128:
            tk //= 2
        elif tm > tm_align:
            tm //= 2
        else:
            break
    return _round_down(tm, tm_align), tk


# ---------------------------------------------------------------------------
# Fused matmul + bias + LayerNorm + ReLU
# ---------------------------------------------------------------------------
def fused_matmul_layernorm_relu(x2d, w2d, b, gamma, beta, *,
                                matmul_dtype=jnp.bfloat16, tm_max=512):
    """ReLU(LayerNorm_N(x2d @ w2d + b)) fused in one Pallas kernel.

    x2d: [M, K], w2d: [K, N], b/gamma/beta: [N].  Returns [M, N] in x2d.dtype.
    The matmul runs on the MXU in `matmul_dtype` (default bf16 = native MXU
    input dtype on v5e/v6e/v7x) with f32 accumulation; LayerNorm statistics
    always use f32.
    """
    M, K = x2d.shape
    K2, N = w2d.shape
    assert K == K2
    out_dtype = x2d.dtype
    out_itemsize = jnp.dtype(out_dtype).itemsize

    if matmul_dtype is not None:
        x2d = x2d.astype(matmul_dtype)
        w2d = w2d.astype(matmul_dtype)
    itemsize = jnp.dtype(x2d.dtype).itemsize
    tm_align = 16 if itemsize == 2 else 8          # bf16 sublane packing

    # --- lane-dense channel dim: pad N to a multiple of 128 ------------------
    n_pad = _round_up(N, 128)
    if n_pad != N:
        w2d = jnp.pad(w2d, ((0, 0), (0, n_pad - N)))
    inv_n = 1.0 / float(N)                         # LN stats use the real N

    def _pad_param(p):
        p = p.reshape(1, N).astype(jnp.float32)
        return jnp.pad(p, ((0, 0), (0, n_pad - N))) if n_pad != N else p

    b2, g2, be2 = _pad_param(b), _pad_param(gamma), _pad_param(beta)

    # --- generation-aware VMEM budgeting -------------------------------------
    cap = _tpu_vmem_capacity_bytes()
    budget = min(int(cap * 0.72), 100 << 20)       # ~46 MiB on v7x, ~92 MiB on v5e/v6e
    resident_threshold = min(24 << 20, budget // 3)
    resident = K * n_pad * itemsize <= resident_threshold

    tm, tk = _choose_tiles(M, K, n_pad, itemsize, out_itemsize, budget,
                           tm_align, resident, tm_max=tm_max)

    # --- K padding (K-tiled path only; zeros add 0 to the dot) ---------------
    if not resident:
        Kp = _round_up(K, tk)
        if Kp != K:
            x2d = jnp.pad(x2d, ((0, 0), (0, Kp - K)))
            w2d = jnp.pad(w2d, ((0, Kp - K), (0, 0)))
        K = Kp
    n_k = 1 if resident else K // tk

    # --- ragged M: pad with zero rows (sliced off after) ---------------------
    Mp = _round_up(M, tm)
    if Mp != M:
        x2d = jnp.pad(x2d, ((0, Mp - M), (0, 0)))
    n_m = Mp // tm

    single_buf = dict(pipeline_mode=pl.Buffered(1))   # invariant blocks: 1 buffer

    if resident:
        kernel = functools.partial(_fused_kernel, inv_n=inv_n)
        grid_spec = pltpu.PrefetchScalarGridSpec(
            num_scalar_prefetch=0,
            grid=(n_m,),
            in_specs=[
                pl.BlockSpec((tm, K), lambda i: (i, 0)),
                pl.BlockSpec((K, n_pad), lambda i: (0, 0), **single_buf),
                pl.BlockSpec((1, n_pad), lambda i: (0, 0), **single_buf),
                pl.BlockSpec((1, n_pad), lambda i: (0, 0), **single_buf),
                pl.BlockSpec((1, n_pad), lambda i: (0, 0), **single_buf),
            ],
            out_specs=pl.BlockSpec((tm, n_pad), lambda i: (i, 0)),
        )
        dim_sem = ("parallel",)
        use_acc = False
        w_streams = 1
    else:
        use_acc = out_itemsize != 4
        if use_acc:
            kernel = functools.partial(_fused_kernel_ktiled_acc, inv_n=inv_n)
            scratch = [pltpu.VMEM((tm, n_pad), jnp.float32)]
        else:
            # f32 output: accumulate directly into the resident out block.
            kernel = functools.partial(_fused_kernel_ktiled_inplace, inv_n=inv_n)
            scratch = []
        grid_spec = pltpu.PrefetchScalarGridSpec(
            num_scalar_prefetch=0,
            grid=(n_m, n_k),
            in_specs=[
                pl.BlockSpec((tm, tk), lambda i, j: (i, j)),
                pl.BlockSpec((tk, n_pad), lambda i, j: (j, 0)),   # varies with j -> 2 bufs
                pl.BlockSpec((1, n_pad), lambda i, j: (0, 0), **single_buf),
                pl.BlockSpec((1, n_pad), lambda i, j: (0, 0), **single_buf),
                pl.BlockSpec((1, n_pad), lambda i, j: (0, 0), **single_buf),
            ],
            out_specs=pl.BlockSpec((tm, n_pad), lambda i, j: (i, 0)),
            scratch_shapes=scratch,
        )
        dim_sem = ("parallel", "arbitrary")
        w_streams = n_m                                # weight re-streamed per row tile

    # TODO(synk): on v7x verify the 'parallel' M axis actually shards across
    #             both TensorCores (else switch to pltpu.CORE_PARALLEL).
    est = _vmem_estimate(tm, tk, n_pad, n_k, itemsize, out_itemsize, use_acc)
    vmem_limit = int(min(max(est + (16 << 20), 32 << 20), cap - (8 << 20)))

    out = pl.pallas_call(
        kernel,
        out_shape=jax.ShapeDtypeStruct((Mp, n_pad), out_dtype),
        grid_spec=grid_spec,
        compiler_params=pltpu.CompilerParams(
            dimension_semantics=dim_sem,
            vmem_limit_bytes=vmem_limit,
        ),
        cost_estimate=pl.CostEstimate(
            flops=2 * Mp * K * n_pad,
            transcendentals=Mp,        # one rsqrt per output row
            bytes_accessed=(Mp * K + w_streams * K * n_pad) * itemsize
                           + 3 * n_pad * 4 + Mp * n_pad * out_itemsize,
        ),
    )(x2d, w2d, b2, g2, be2)

    if (Mp, n_pad) != (M, N):
        out = out[:M, :N]
    return out


# ---------------------------------------------------------------------------
# ConvBlock forward (reflect-padded strided conv -> LayerNorm(C) -> ReLU)
# ---------------------------------------------------------------------------
def conv_block_forward(x, w, b, gamma, beta, *, stride,
                       matmul_dtype=jnp.bfloat16, out_layout="NCHW"):
    """x: [B, Cin, H, W] (NCHW), w: [Cout, Cin, k, k], b/gamma/beta: [Cout].

    Returns [B, Cout, Ho, Wo] (NCHW, default) or [B, Ho, Wo, Cout] when
    out_layout="NHWC" (skips one full HBM read+write pass over the output).
    """
    B, Cin, H, W = x.shape
    Cout, Cin2, k, k2 = w.shape
    assert Cin == Cin2 and k == k2

    p = (k - 1) // 2
    Ho = (H + 2 * p - k) // stride + 1
    Wo = (W + 2 * p - k) // stride + 1

    # Transpose only the *small* input to NHWC, then build the im2col patches
    # directly in their final [M, K] layout (no transpose of the k^2-inflated
    # tensor).
    x_nhwc = jnp.transpose(x, (0, 2, 3, 1))
    xp = (jnp.pad(x_nhwc, ((0, 0), (p, p), (p, p), (0, 0)), mode="reflect")
          if p else x_nhwc)
    # TODO(synk): fully fuse im2col into the Pallas kernel (accumulate over the
    #             k*k taps with shifted windows) to avoid materializing the
    #             k^2-inflated patch tensor in HBM.
    cols = []
    for kh in range(k):
        for kw in range(k):
            cols.append(xp[:, kh:kh + stride * (Ho - 1) + 1:stride,
                              kw:kw + stride * (Wo - 1) + 1:stride, :])
    patches = jnp.stack(cols, axis=3)                     # [B, Ho, Wo, k*k, Cin]
    patches = patches.reshape(B * Ho * Wo, k * k * Cin)   # flatten (kh, kw, cin)

    # Weight flattened in the same (kh, kw, cin) order.
    w2d = jnp.transpose(w, (2, 3, 1, 0)).reshape(k * k * Cin, Cout)

    y2d = fused_matmul_layernorm_relu(patches, w2d, b, gamma, beta,
                                      matmul_dtype=matmul_dtype)
    y = y2d.reshape(B, Ho, Wo, Cout)
    if out_layout == "NHWC":
        return y
    return jnp.transpose(y, (0, 3, 1, 2))


# ---------------------------------------------------------------------------
# Pure-JAX reference: reflect-padded conv -> LayerNorm over channels -> ReLU
# ---------------------------------------------------------------------------
def _reference(x, w, b, gamma, beta, *, stride, matmul_dtype=None):
    if matmul_dtype is not None:       # emulate the kernel's MXU input rounding
        x = x.astype(matmul_dtype).astype(jnp.float32)
        w = w.astype(matmul_dtype).astype(jnp.float32)
    k = w.shape[-1]
    p = (k - 1) // 2
    xp = jnp.pad(x, ((0, 0), (0, 0), (p, p), (p, p)), mode="reflect") if p else x
    y = jax.lax.conv_general_dilated(
        xp, w, window_strides=(stride, stride), padding="VALID",
        dimension_numbers=("NCHW", "OIHW", "NCHW"),
        precision=jax.lax.Precision.HIGHEST,
    ) + b[None, :, None, None]
    y = jnp.transpose(y, (0, 2, 3, 1))
    mean = jnp.mean(y, axis=-1, keepdims=True)
    var = jnp.mean((y - mean) ** 2, axis=-1, keepdims=True)
    y = (y - mean) / jnp.sqrt(var + EPS) * gamma + beta
    y = jnp.maximum(y, 0.0)
    return jnp.transpose(y, (0, 3, 1, 2))


# ---------------------------------------------------------------------------
# Demo
# ---------------------------------------------------------------------------
if __name__ == "__main__":
    key = jax.random.PRNGKey(0)
    k_x, k_w, k_b, k_g, k_be = jax.random.split(key, 5)

    batch, in_channels, H, W = 2, 4, 16, 16
    out_channels, kernel_size, stride = 32, 3, 2

    x = jax.random.normal(k_x, (batch, in_channels, H, W), dtype=jnp.float32)
    w = jax.random.normal(
        k_w, (out_channels, in_channels, kernel_size, kernel_size),
        dtype=jnp.float32) * 0.1
    b = jax.random.normal(k_b, (out_channels,), dtype=jnp.float32) * 0.1
    gamma = 1.0 + 0.1 * jax.random.normal(k_g, (out_channels,), dtype=jnp.float32)
    beta = 0.1 * jax.random.normal(k_be, (out_channels,), dtype=jnp.float32)

    # Default path: bf16 MXU inputs, f32 accumulation + f32 LayerNorm stats.
    out_bf16 = conv_block_forward(x, w, b, gamma, beta, stride=stride)
    out_bf16 = jax.block_until_ready(out_bf16)
    ref_bf16 = _reference(x, w, b, gamma, beta, stride=stride,
                          matmul_dtype=jnp.bfloat16)
    assert out_bf16.shape == ref_bf16.shape, (out_bf16.shape, ref_bf16.shape)
    assert jnp.allclose(out_bf16, ref_bf16, atol=2e-3, rtol=2e-3), \
        "bf16 path mismatch vs reference"

    # Full f32 path: tight check against the f32 reference.
    out_f32 = conv_block_forward(x, w, b, gamma, beta, stride=stride,
                                 matmul_dtype=jnp.float32)
    out_f32 = jax.block_until_ready(out_f32)
    ref_f32 = _reference(x, w, b, gamma, beta, stride=stride)
    assert jnp.allclose(out_f32, ref_f32, atol=1e-4, rtol=1e-4), \
        "f32 path mismatch vs reference"

    print("KERNEL_OK")
</pallas_src>

<mosaic_0001>
module attributes {stable_mosaic.version = 11 : i64} {
  func.func @_fused_kernel(%arg0: i32, %arg1: memref<128x36xbf16, #tpu.memory_space<vmem>>, %arg2: memref<36x128xbf16, #tpu.memory_space<vmem>>, %arg3: memref<1x128xf32, #tpu.memory_space<vmem>>, %arg4: memref<1x128xf32, #tpu.memory_space<vmem>>, %arg5: memref<1x128xf32, #tpu.memory_space<vmem>>, %arg6: memref<128x128xf32, #tpu.memory_space<vmem>>) attributes {dimension_semantics = [#tpu.dimension_semantics<parallel>], iteration_bounds = array<i64: 1>, scalar_prefetch = 0 : i64, scratch_operands = 0 : i64, tpu.core_type = #tpu.core_type<tc>, window_params = [{transform_indices = @transform_0, window_bounds = array<i64: 128, 36>}, {pipeline_mode = #tpu.pipeline_mode<synchronous>, transform_indices = @transform_1, window_bounds = array<i64: 36, 128>}, {pipeline_mode = #tpu.pipeline_mode<synchronous>, transform_indices = @transform_2, window_bounds = array<i64: 1, 128>}, {pipeline_mode = #tpu.pipeline_mode<synchronous>, transform_indices = @transform_3, window_bounds = array<i64: 1, 128>}, {pipeline_mode = #tpu.pipeline_mode<synchronous>, transform_indices = @transform_4, window_bounds = array<i64: 1, 128>}, {transform_indices = @transform_5, window_bounds = array<i64: 128, 128>}]} {
    %c0 = arith.constant 0 : index
    %c0_0 = arith.constant 0 : index
    %0 = vector.load %arg1[%c0, %c0_0] : memref<128x36xbf16, #tpu.memory_space<vmem>>, vector<128x36xbf16>
    %c0_1 = arith.constant 0 : index
    %c0_2 = arith.constant 0 : index
    %1 = vector.load %arg2[%c0_1, %c0_2] : memref<36x128xbf16, #tpu.memory_space<vmem>>, vector<36x128xbf16>
    %cst = arith.constant dense<0.000000e+00> : vector<128x128xf32>
    %2 = tpu.matmul %0, %1, %cst {dimension_numbers = #tpu.dot_dimension_numbers<[1], [0], [0], [1], [0, 0, 1, 1], [], []>} : vector<128x36xbf16>, vector<36x128xbf16>, vector<128x128xf32> -> vector<128x128xf32>
    %c0_3 = arith.constant 0 : index
    %c0_4 = arith.constant 0 : index
    %3 = vector.load %arg3[%c0_3, %c0_4] : memref<1x128xf32, #tpu.memory_space<vmem>>, vector<1x128xf32>
    %4 = vector.broadcast %3 : vector<1x128xf32> to vector<128x128xf32>
    %5 = arith.addf %2, %4 : vector<128x128xf32>
    %cst_5 = arith.constant dense<0.000000e+00> : vector<128xf32>
    %6 = vector.multi_reduction <add>, %5, %cst_5 [1] : vector<128x128xf32> to vector<128xf32>
    %7 = vector.shape_cast %6 : vector<128xf32> to vector<128x1xf32>
    %8 = arith.mulf %5, %5 : vector<128x128xf32>
    %cst_6 = arith.constant dense<0.000000e+00> : vector<128xf32>
    %9 = vector.multi_reduction <add>, %8, %cst_6 [1] : vector<128x128xf32> to vector<128xf32>
    %10 = vector.shape_cast %9 : vector<128xf32> to vector<128x1xf32>
    %cst_7 = arith.constant 3.125000e-02 : f32
    %11 = vector.broadcast %cst_7 : f32 to vector<128x1xf32>
    %12 = arith.mulf %7, %11 : vector<128x1xf32>
    %cst_8 = arith.constant 3.125000e-02 : f32
    %13 = vector.broadcast %cst_8 : f32 to vector<128x1xf32>
    %14 = arith.mulf %10, %13 : vector<128x1xf32>
    %15 = arith.mulf %12, %12 : vector<128x1xf32>
    %16 = arith.subf %14, %15 : vector<128x1xf32>
    %cst_9 = arith.constant 0.000000e+00 : f32
    %17 = vector.broadcast %cst_9 : f32 to vector<128x1xf32>
    %18 = arith.maximumf %16, %17 : vector<128x1xf32>
    %cst_10 = arith.constant 9.99999974E-6 : f32
    %19 = vector.broadcast %cst_10 : f32 to vector<128x1xf32>
    %20 = arith.addf %18, %19 : vector<128x1xf32>
    %21 = math.rsqrt %20 : vector<128x1xf32>
    %c0_11 = arith.constant 0 : index
    %c0_12 = arith.constant 0 : index
    %22 = vector.load %arg4[%c0_11, %c0_12] : memref<1x128xf32, #tpu.memory_space<vmem>>, vector<1x128xf32>
    %23 = vector.broadcast %21 : vector<128x1xf32> to vector<128x128xf32>
    %24 = vector.broadcast %22 : vector<1x128xf32> to vector<128x128xf32>
    %25 = arith.mulf %23, %24 : vector<128x128xf32>
    %26 = vector.broadcast %12 : vector<128x1xf32> to vector<128x128xf32>
    %27 = arith.subf %5, %26 : vector<128x128xf32>
    %28 = arith.mulf %27, %25 : vector<128x128xf32>
    %c0_13 = arith.constant 0 : index
    %c0_14 = arith.constant 0 : index
    %29 = vector.load %arg5[%c0_13, %c0_14] : memref<1x128xf32, #tpu.memory_space<vmem>>, vector<1x128xf32>
    %30 = vector.broadcast %29 : vector<1x128xf32> to vector<128x128xf32>
    %31 = arith.addf %28, %30 : vector<128x128xf32>
    %cst_15 = arith.constant 0.000000e+00 : f32
    %32 = vector.broadcast %cst_15 : f32 to vector<128x128xf32>
    %33 = arith.maximumf %31, %32 : vector<128x128xf32>
    %c0_16 = arith.constant 0 : index
    %c0_17 = arith.constant 0 : index
    %34 = vector.load %arg6[%c0_16, %c0_17] : memref<128x128xf32, #tpu.memory_space<vmem>>, vector<128x128xf32>
    tpu.vector_store %arg6[%c0_16, %c0_17], %33 {strides = array<i32>} : memref<128x128xf32, #tpu.memory_space<vmem>>, vector<128x128xf32>,
    return
  }
  func.func @transform_0(%arg0: i32) -> (i32, i32) {
    %c0_i32 = arith.constant 0 : i32
    %c0_i32_0 = arith.constant 0 : i32
    return %arg0, %c0_i32 : i32, i32
  }
  func.func @transform_1(%arg0: i32) -> (i32, i32) {
    %c0_i32 = arith.constant 0 : i32
    %c0_i32_0 = arith.constant 0 : i32
    %c0_i32_1 = arith.constant 0 : i32
    return %c0_i32, %c0_i32_0 : i32, i32
  }
  func.func @transform_2(%arg0: i32) -> (i32, i32) {
    %c0_i32 = arith.constant 0 : i32
    %c0_i32_0 = arith.constant 0 : i32
    %c0_i32_1 = arith.constant 0 : i32
    return %c0_i32, %c0_i32_0 : i32, i32
  }
  func.func @transform_3(%arg0: i32) -> (i32, i32) {
    %c0_i32 = arith.constant 0 : i32
    %c0_i32_0 = arith.constant 0 : i32
    %c0_i32_1 = arith.constant 0 : i32
    return %c0_i32, %c0_i32_0 : i32, i32
  }
  func.func @transform_4(%arg0: i32) -> (i32, i32) {
    %c0_i32 = arith.constant 0 : i32
    %c0_i32_0 = arith.constant 0 : i32
    %c0_i32_1 = arith.constant 0 : i32
    return %c0_i32, %c0_i32_0 : i32, i32
  }
  func.func @transform_5(%arg0: i32) -> (i32, i32) {
    %c0_i32 = arith.constant 0 : i32
    %c0_i32_0 = arith.constant 0 : i32
    return %arg0, %c0_i32 : i32, i32
  }
}

</mosaic_0001>

<llo_original>
// kernel: tpu_custom_call.1
$region0: #{tpu_custom_call.1}
  #allocation0 [shape = 'u32[]', space=smem, size = 0x4, offset = 0x4, fixed_abs, tag = 'smem constant byte address 0x4 - core index']
  #allocation1 [shape = 'u32[144,128]{1,0:T(1,128)}', space=vmem, size = 0x12000, scoped, tag = 'internal scratch']
  %s0 = inlined_call_operand.vmem [shape: bf16[128,36], index: 0, kind: input, shape index: {}]
  %s1 = inlined_call_operand.vmem [shape: bf16[36,128], index: 1, kind: input, shape index: {}]
  %s2 = inlined_call_operand.vmem [shape: f32[1,128], index: 2, kind: input, shape index: {}]
  %s3 = inlined_call_operand.vmem [shape: f32[1,128], index: 3, kind: input, shape index: {}]
  %s4 = inlined_call_operand.vmem [shape: f32[1,128], index: 4, kind: input, shape index: {}]
  %s5 = inlined_call_operand.hbm [shape: f32[128,128], index: 5, kind: output, shape index: {}]
  %s6 = sld [smem:[#allocation0]]
  $region30: #{tpu_custom_call.1} parent=0
    _
  %s8 = ssub.s32 1, %s6
  %s9 = scalar_select 0, %s8, %s6
  $region1: #{tpu_custom_call.1} parent=0
    #allocation2 [shape = 'u8[65536]{0}', space=vmem, size = 0x10000, scoped, tag = 'output window, operand 0, single buffered']
    #allocation3 [shape = 's32[1]{0}', space=sflag, size = 0x4, scoped, tag = 'scoped memory for tpu_custom_call.1']
    %10 = vsyncpa [#allocation3], 0
    // Predicated region
    $region2: #{tpu_custom_call.1} parent=1 // pred_check
      _
    $region3: #{tpu_custom_call.1} parent=1 // pred_check_branch
      %12 = sbr.rel (0) target = $region5
    $region4: #{tpu_custom_call.1} parent=1 // pred_region
      _
    $region5: #{tpu_custom_call.1} parent=1 // pred_fallthru
      _
    // Predicated region
    $region6: #{tpu_custom_call.1} parent=1 // pred_check
      _
    $region7: #{tpu_custom_call.1} parent=1 // pred_check_branch
      %14 = sbr.rel (0) target = $region9
    $region8: #{tpu_custom_call.1} parent=1 // pred_region
      _
    $region9: #{tpu_custom_call.1} parent=1 // pred_fallthru
      _
    // Predicated region
    $region10: #{tpu_custom_call.1} parent=1 // pred_check
      _
    $region11: #{tpu_custom_call.1} parent=1 // pred_check_branch
      %16 = sbr.rel (0) target = $region13
    $region12: #{tpu_custom_call.1} parent=1 // pred_region
      _
    $region13: #{tpu_custom_call.1} parent=1 // pred_fallthru
      _
    // Predicated region
    $region14: #{tpu_custom_call.1} parent=1 // pred_check
      _
    $region15: #{tpu_custom_call.1} parent=1 // pred_check_branch
      %18 = sbr.rel (0) target = $region17
    $region16: #{tpu_custom_call.1} parent=1 // pred_region
      _
    $region17: #{tpu_custom_call.1} parent=1 // pred_fallthru
      _
    // Predicated region
    $region18: #{tpu_custom_call.1} parent=1 // pred_check
      _
    $region19: #{tpu_custom_call.1} parent=1 // pred_check_branch
      %20 = sbr.rel (0) target = $region21
    $region20: #{tpu_custom_call.1} parent=1 // pred_region
      _
    $region21: #{tpu_custom_call.1} parent=1 // pred_fallthru
      _
    %v22 = vld [vmem:[%s0] sm:$0xf]
    %v23 = vld [vmem:[%s0 + $0x4] sm:$0xf]
    %v24 = vld [vmem:[%s0 + $0x8] sm:$0xf]
    %v25 = vld [vmem:[%s0 + $0xc] sm:$0xf]
    %v26 = vld [vmem:[%s0 + $0x10] sm:$0xf]
    %v27 = vld [vmem:[%s0 + $0x14] sm:$0xf]
    %v28 = vld [vmem:[%s0 + $0x18] sm:$0xf]
    %v29 = vld [vmem:[%s0 + $0x1c] sm:$0xf]
    %v30 = vld [vmem:[%s0 + $0x20] sm:$0xf]
    %v31 = vld [vmem:[%s0 + $0x24] sm:$0xf]
    %v32 = vld [vmem:[%s0 + $0x28] sm:$0xf]
    %v33 = vld [vmem:[%s0 + $0x2c] sm:$0xf]
    %v34 = vld [vmem:[%s0 + $0x30] sm:$0xf]
    %v35 = vld [vmem:[%s0 + $0x34] sm:$0xf]
    %v36 = vld [vmem:[%s0 + $0x38] sm:$0xf]
    %v37 = vld [vmem:[%s0 + $0x3c] sm:$0xf]
    %v38 = vld [vmem:[%s1] sm:$0xf]
    %v39 = vld [vmem:[%s1 + $0x4] sm:$0xf]
    %v40 = vld [vmem:[%s1 + $0x8] sm:$0xf]
    %v41 = vld [vmem:[%s1 + $0xc] sm:$0xf]
    %v42 = vld [vmem:[%s1 + $0x10] sm:$0x3]
    %v43 = vld [vmem:[%s2] sm:$0x1]
    %v45 = vlaneseq
    %v46 = vshrl.u32 %v45, 7
    %v47 = vsub.s32 0, %v46
    %v48 = vrot.slane %v43, %v47
    %v66 = vunpack.c.l.b16 %v22
    %v67 = vunpack.c.l.b16 %v23
    %v68 = vunpack.c.l.b16 %v24
    %v69 = vunpack.c.l.b16 %v25
    %v70 = vunpack.c.l.b16 %v26
    %v71 = vunpack.c.l.b16 %v27
    %v72 = vunpack.c.l.b16 %v28
    %v73 = vunpack.c.l.b16 %v29
    %v74 = vunpack.c.l.b16 %v30
    %v75 = vunpack.c.l.b16 %v31
    %v76 = vunpack.c.l.b16 %v32
    %v77 = vunpack.c.l.b16 %v33
    %v78 = vunpack.c.l.b16 %v34
    %v79 = vunpack.c.l.b16 %v35
    %v80 = vunpack.c.l.b16 %v36
    %v81 = vunpack.c.l.b16 %v37
    %v82 = vpack.c.b16 %v67, %v66
    %v83 = vpack.c.b16 %v69, %v68
    %v84 = vpack.c.b16 %v71, %v70
    %v85 = vpack.c.b16 %v73, %v72
    %v86 = vpack.c.b16 %v75, %v74
    %v87 = vpack.c.b16 %v77, %v76
    %v88 = vpack.c.b16 %v79, %v78
    %v89 = vpack.c.b16 %v81, %v80
    %v95 = vunpack.c.l.b16 %v38
    %v96 = vunpack.c.l.b16 %v39
    %v97 = vunpack.c.l.b16 %v40
    %v98 = vunpack.c.l.b16 %v41
    %v99 = vunpack.c.l.b16 %v42
    %v100 = vpack.c.b16 %v96, %v95
    %v101 = vpack.c.b16 %v98, %v97
    %v102 = vpack.c.b16 %v99, %v99
    %vm105 = vcmask 293888
    %v107 = vsel %vm105, %v82, 0
    %v110 = vsel %vm105, %v83, 0
    %v113 = vsel %vm105, %v84, 0
    %v116 = vsel %vm105, %v85, 0
    %v119 = vsel %vm105, %v86, 0
    %v122 = vsel %vm105, %v87, 0
    %v125 = vsel %vm105, %v88, 0
    %v128 = vsel %vm105, %v89, 0
    %vm130 = vcmask 1041408
    %v132 = vsel %vm130, %v102, 0
    %134 = vmatprep.subr.bf16.mxu0 0
    %135 = vmatpush1.bf16.msra.mxu0 %v100
    %136 = vmatprep.subr.bf16.mxu0 0
    %137 = vmatpush1.bf16.msra.mxu0 %v101
    %138 = vmatprep.subr.bf16.mxu0 0
    %139 = vmatpush1.bf16.msra.mxu0 %v132
    %140 = vmatprep.subr.bf16.mxu0 0
    %141 = vmatpush1.bf16.msra.mxu0 0
    %142 = vmatprep.subr.bf16.mxu0 0
    %143 = vmatpush1.bf16.msra.mxu0 0
    %144 = vmatprep.subr.bf16.mxu0 0
    %145 = vmatpush1.bf16.msra.mxu0 0
    %146 = vmatprep.subr.bf16.mxu0 0
    %147 = vmatpush1.bf16.msra.mxu0 0
    %148 = vmatprep.subr.bf16.mxu0 0
    %149 = vmatpush1.bf16.msra.mxu0 0
    %150 = vmatprep.subr.bf16.mxu0 0
    %151 = vmatpush1.bf16.msra.mxu0 0
    %152 = vmatprep.subr.bf16.mxu0 0
    %153 = vmatpush1.bf16.msra.mxu0 0
    %154 = vmatprep.subr.bf16.mxu0 0
    %155 = vmatpush1.bf16.msra.mxu0 0
    %156 = vmatprep.subr.bf16.mxu0 0
    %157 = vmatpush1.bf16.msra.mxu0 0
    %158 = vmatprep.subr.bf16.mxu0 0
    %159 = vmatpush1.bf16.msra.mxu0 0
    %160 = vmatprep.subr.bf16.mxu0 0
    %161 = vmatpush1.bf16.msra.mxu0 0
    %162 = vmatprep.subr.bf16.mxu0 0
    %163 = vmatpush1.bf16.msra.mxu0 0
    %164 = vmatprep.subr.bf16.mxu0 0
    %165 = vmatpush1.bf16.msra.mxu0 0
    %166 = vmatprep.mubr.bf16.mxu0 0
    %167 = vmatmul.mubr.bf16.gmra.mrb[0].mxu0 %v107
    %v168 = vpop.f32.mrb[0].mxu0
    %v169 = vadd.f32 %v48, %v168
    %v170 = vpop.f32.mrb[0].mxu0
    %v171 = vpop.f32.mrb[0].mxu0
    %v172 = vadd.f32 %v48, %v171
    %v173 = vpop.f32.mrb[0].mxu0
    %174 = vmatprep.mubr.bf16.mxu0 0
    %175 = vmatmul.mubr.bf16.gmra.mrb[0].mxu0 %v110
    %v176 = vpop.f32.mrb[0].mxu0
    %v177 = vadd.f32 %v48, %v176
    %v178 = vpop.f32.mrb[0].mxu0
    %v179 = vpop.f32.mrb[0].mxu0
    %v180 = vadd.f32 %v48, %v179
    %v181 = vpop.f32.mrb[0].mxu0
    %182 = vmatprep.mubr.bf16.mxu0 0
    %183 = vmatmul.mubr.bf16.gmra.mrb[0].mxu0 %v113
    %v184 = vpop.f32.mrb[0].mxu0
    %v185 = vadd.f32 %v48, %v184
    %v186 = vpop.f32.mrb[0].mxu0
    %v187 = vpop.f32.mrb[0].mxu0
    %v188 = vadd.f32 %v48, %v187
    %v189 = vpop.f32.mrb[0].mxu0
    %190 = vmatprep.mubr.bf16.mxu0 0
    %191 = vmatmul.mubr.bf16.gmra.mrb[0].mxu0 %v116
    %v192 = vpop.f32.mrb[0].mxu0
    %v193 = vadd.f32 %v48, %v192
    %v194 = vpop.f32.mrb[0].mxu0
    %v195 = vpop.f32.mrb[0].mxu0
    %v196 = vadd.f32 %v48, %v195
    %v197 = vpop.f32.mrb[0].mxu0
    %198 = vmatprep.mubr.bf16.mxu0 0
    %199 = vmatmul.mubr.bf16.gmra.mrb[0].mxu0 %v119
    %v200 = vpop.f32.mrb[0].mxu0
    %v201 = vadd.f32 %v48, %v200
    %v202 = vpop.f32.mrb[0].mxu0
    %v203 = vpop.f32.mrb[0].mxu0
    %v204 = vadd.f32 %v48, %v203
    %v205 = vpop.f32.mrb[0].mxu0
    %206 = vmatprep.mubr.bf16.mxu0 0
    %207 = vmatmul.mubr.bf16.gmra.mrb[0].mxu0 %v122
    %v208 = vpop.f32.mrb[0].mxu0
    %v209 = vadd.f32 %v48, %v208
    %v210 = vpop.f32.mrb[0].mxu0
    %v211 = vpop.f32.mrb[0].mxu0
    %v212 = vadd.f32 %v48, %v211
    %v213 = vpop.f32.mrb[0].mxu0
    %214 = vmatprep.mubr.bf16.mxu0 0
    %215 = vmatmul.mubr.bf16.gmra.mrb[0].mxu0 %v125
    %v216 = vpop.f32.mrb[0].mxu0
    %v217 = vadd.f32 %v48, %v216
    %v218 = vpop.f32.mrb[0].mxu0
    %v219 = vpop.f32.mrb[0].mxu0
    %v220 = vadd.f32 %v48, %v219
    %v221 = vpop.f32.mrb[0].mxu0
    %222 = vmatprep.mubr.bf16.mxu0 0
    %223 = vmatmul.mubr.bf16.gmra.mrb[0].mxu0 %v128
    %v224 = vpop.f32.mrb[0].mxu0
    %v225 = vadd.f32 %v48, %v224
    %v226 = vpop.f32.mrb[0].mxu0
    %v227 = vpop.f32.mrb[0].mxu0
    %v228 = vadd.f32 %v48, %v227
    %v229 = vpop.f32.mrb[0].mxu0
    %230 = vdwg.mxu0
    %231 = vadd.xlane.f32.xlu0 %v169
    %v232 = vpop.xlane.xlu0 %231
    %233 = vadd.xlane.f32.xlu0 %v172
    %v234 = vpop.xlane.xlu0 %233
    %235 = vadd.xlane.f32.xlu0 %v177
    %v236 = vpop.xlane.xlu0 %235
    %237 = vadd.xlane.f32.xlu0 %v180
    %v238 = vpop.xlane.xlu0 %237
    %239 = vadd.xlane.f32.xlu0 %v185
    %v240 = vpop.xlane.xlu0 %239
    %241 = vadd.xlane.f32.xlu0 %v188
    %v242 = vpop.xlane.xlu0 %241
    %243 = vadd.xlane.f32.xlu0 %v193
    %v244 = vpop.xlane.xlu0 %243
    %245 = vadd.xlane.f32.xlu0 %v196
    %v246 = vpop.xlane.xlu0 %245
    %247 = vadd.xlane.f32.xlu0 %v201
    %v248 = vpop.xlane.xlu0 %247
    %249 = vadd.xlane.f32.xlu0 %v204
    %v250 = vpop.xlane.xlu0 %249
    %251 = vadd.xlane.f32.xlu0 %v209
    %v252 = vpop.xlane.xlu0 %251
    %253 = vadd.xlane.f32.xlu0 %v212
    %v254 = vpop.xlane.xlu0 %253
    %255 = vadd.xlane.f32.xlu0 %v217
    %v256 = vpop.xlane.xlu0 %255
    %257 = vadd.xlane.f32.xlu0 %v220
    %v258 = vpop.xlane.xlu0 %257
    %259 = vadd.xlane.f32.xlu0 %v225
    %v260 = vpop.xlane.xlu0 %259
    %261 = vadd.xlane.f32.xlu0 %v228
    %v262 = vpop.xlane.xlu0 %261
    %v263 = vmul.f32 %v169, %v169
    %v264 = vmul.f32 %v172, %v172
    %v265 = vmul.f32 %v177, %v177
    %v266 = vmul.f32 %v180, %v180
    %v267 = vmul.f32 %v185, %v185
    %v268 = vmul.f32 %v188, %v188
    %v269 = vmul.f32 %v193, %v193
    %v270 = vmul.f32 %v196, %v196
    %v271 = vmul.f32 %v201, %v201
    %v272 = vmul.f32 %v204, %v204
    %v273 = vmul.f32 %v209, %v209
    %v274 = vmul.f32 %v212, %v212
    %v275 = vmul.f32 %v217, %v217
    %v276 = vmul.f32 %v220, %v220
    %v277 = vmul.f32 %v225, %v225
    %v278 = vmul.f32 %v228, %v228
    %279 = vadd.xlane.f32.xlu0 %v263
    %v280 = vpop.xlane.xlu0 %279
    %281 = vadd.xlane.f32.xlu0 %v264
    %v282 = vpop.xlane.xlu0 %281
    %283 = vadd.xlane.f32.xlu0 %v265
    %v284 = vpop.xlane.xlu0 %283
    %285 = vadd.xlane.f32.xlu0 %v266
    %v286 = vpop.xlane.xlu0 %285
    %287 = vadd.xlane.f32.xlu0 %v267
    %v288 = vpop.xlane.xlu0 %287
    %289 = vadd.xlane.f32.xlu0 %v268
    %v290 = vpop.xlane.xlu0 %289
    %291 = vadd.xlane.f32.xlu0 %v269
    %v292 = vpop.xlane.xlu0 %291
    %293 = vadd.xlane.f32.xlu0 %v270
    %v294 = vpop.xlane.xlu0 %293
    %295 = vadd.xlane.f32.xlu0 %v271
    %v296 = vpop.xlane.xlu0 %295
    %297 = vadd.xlane.f32.xlu0 %v272
    %v298 = vpop.xlane.xlu0 %297
    %299 = vadd.xlane.f32.xlu0 %v273
    %v300 = vpop.xlane.xlu0 %299
    %301 = vadd.xlane.f32.xlu0 %v274
    %v302 = vpop.xlane.xlu0 %301
    %303 = vadd.xlane.f32.xlu0 %v275
    %v304 = vpop.xlane.xlu0 %303
    %305 = vadd.xlane.f32.xlu0 %v276
    %v306 = vpop.xlane.xlu0 %305
    %307 = vadd.xlane.f32.xlu0 %v277
    %v308 = vpop.xlane.xlu0 %307
    %309 = vadd.xlane.f32.xlu0 %v278
    %v310 = vpop.xlane.xlu0 %309
    %v311 = vmul.f32 %v232, 0.03125
    %v312 = vmul.f32 %v234, 0.03125
    %v313 = vmul.f32 %v236, 0.03125
    %v314 = vmul.f32 %v238, 0.03125
    %v315 = vmul.f32 %v240, 0.03125
    %v316 = vmul.f32 %v242, 0.03125
    %v317 = vmul.f32 %v244, 0.03125
    %v318 = vmul.f32 %v246, 0.03125
    %v319 = vmul.f32 %v248, 0.03125
    %v320 = vmul.f32 %v250, 0.03125
    %v321 = vmul.f32 %v252, 0.03125
    %v322 = vmul.f32 %v254, 0.03125
    %v323 = vmul.f32 %v256, 0.03125
    %v324 = vmul.f32 %v258, 0.03125
    %v325 = vmul.f32 %v260, 0.03125
    %v326 = vmul.f32 %v262, 0.03125
    %v327 = vmul.f32 %v280, 0.03125
    %v328 = vmul.f32 %v282, 0.03125
    %v329 = vmul.f32 %v284, 0.03125
    %v330 = vmul.f32 %v286, 0.03125
    %v331 = vmul.f32 %v288, 0.03125
    %v332 = vmul.f32 %v290, 0.03125
    %v333 = vmul.f32 %v292, 0.03125
    %v334 = vmul.f32 %v294, 0.03125
    %v335 = vmul.f32 %v296, 0.03125
    %v336 = vmul.f32 %v298, 0.03125
    %v337 = vmul.f32 %v300, 0.03125
    %v338 = vmul.f32 %v302, 0.03125
    %v339 = vmul.f32 %v304, 0.03125
    %v340 = vmul.f32 %v306, 0.03125
    %v341 = vmul.f32 %v308, 0.03125
    %v342 = vmul.f32 %v310, 0.03125
    %v343 = vmul.f32 %v311, %v311
    %v344 = vmul.f32 %v312, %v312
    %v345 = vmul.f32 %v313, %v313
    %v346 = vmul.f32 %v314, %v314
    %v347 = vmul.f32 %v315, %v315
    %v348 = vmul.f32 %v316, %v316
    %v349 = vmul.f32 %v317, %v317
    %v350 = vmul.f32 %v318, %v318
    %v351 = vmul.f32 %v319, %v319
    %v352 = vmul.f32 %v320, %v320
    %v353 = vmul.f32 %v321, %v321
    %v354 = vmul.f32 %v322, %v322
    %v355 = vmul.f32 %v323, %v323
    %v356 = vmul.f32 %v324, %v324
    %v357 = vmul.f32 %v325, %v325
    %v358 = vmul.f32 %v326, %v326
    %v359 = vsub.f32 %v327, %v343
    %v360 = vsub.f32 %v328, %v344
    %v361 = vsub.f32 %v329, %v345
    %v362 = vsub.f32 %v330, %v346
    %v363 = vsub.f32 %v331, %v347
    %v364 = vsub.f32 %v332, %v348
    %v365 = vsub.f32 %v333, %v349
    %v366 = vsub.f32 %v334, %v350
    %v367 = vsub.f32 %v335, %v351
    %v368 = vsub.f32 %v336, %v352
    %v369 = vsub.f32 %v337, %v353
    %v370 = vsub.f32 %v338, %v354
    %v371 = vsub.f32 %v339, %v355
    %v372 = vsub.f32 %v340, %v356
    %v373 = vsub.f32 %v341, %v357
    %v374 = vsub.f32 %v342, %v358
    %v375 = vmax.f32 %v359, 0.0
    %v376 = vmax.f32 %v360, 0.0
    %v377 = vmax.f32 %v361, 0.0
    %v378 = vmax.f32 %v362, 0.0
    %v379 = vmax.f32 %v363, 0.0
    %v380 = vmax.f32 %v364, 0.0
    %v381 = vmax.f32 %v365, 0.0
    %v382 = vmax.f32 %v366, 0.0
    %v383 = vmax.f32 %v367, 0.0
    %v384 = vmax.f32 %v368, 0.0
    %v385 = vmax.f32 %v369, 0.0
    %v386 = vmax.f32 %v370, 0.0
    %v387 = vmax.f32 %v371, 0.0
    %v388 = vmax.f32 %v372, 0.0
    %v389 = vmax.f32 %v373, 0.0
    %v390 = vmax.f32 %v374, 0.0
    %v391 = vadd.f32 %v375, 1e-05
    %v392 = vadd.f32 %v376, 1e-05
    %v393 = vadd.f32 %v377, 1e-05
    %v394 = vadd.f32 %v378, 1e-05
    %v395 = vadd.f32 %v379, 1e-05
    %v396 = vadd.f32 %v380, 1e-05
    %v397 = vadd.f32 %v381, 1e-05
    %v398 = vadd.f32 %v382, 1e-05
    %v399 = vadd.f32 %v383, 1e-05
    %v400 = vadd.f32 %v384, 1e-05
    %v401 = vadd.f32 %v385, 1e-05
    %v402 = vadd.f32 %v386, 1e-05
    %v403 = vadd.f32 %v387, 1e-05
    %v404 = vadd.f32 %v388, 1e-05
    %v405 = vadd.f32 %v389, 1e-05
    %v406 = vadd.f32 %v390, 1e-05
    %v407 = vrsqrt.pop %v391
    %v408 = vrsqrt.pop %v392
    %v409 = vrsqrt.pop %v393
    %v410 = vrsqrt.pop %v394
    %v411 = vrsqrt.pop %v395
    %v412 = vrsqrt.pop %v396
    %v413 = vrsqrt.pop %v397
    %v414 = vrsqrt.pop %v398
    %v415 = vrsqrt.pop %v399
    %v416 = vrsqrt.pop %v400
    %v417 = vrsqrt.pop %v401
    %v418 = vrsqrt.pop %v402
    %v419 = vrsqrt.pop %v403
    %v420 = vrsqrt.pop %v404
    %v421 = vrsqrt.pop %v405
    %v422 = vrsqrt.pop %v406
    %v423 = vld [vmem:[%s3] sm:$0x1]
    %v425 = vlaneseq
    %v426 = vshrl.u32 %v425, 7
    %v427 = vsub.s32 0, %v426
    %v428 = vrot.slane %v423, %v427
    %v430 = vmul.f32 %v407, %v428
    %v431 = vmul.f32 %v408, %v428
    %v432 = vmul.f32 %v409, %v428
    %v433 = vmul.f32 %v410, %v428
    %v434 = vmul.f32 %v411, %v428
    %v435 = vmul.f32 %v412, %v428
    %v436 = vmul.f32 %v413, %v428
    %v437 = vmul.f32 %v414, %v428
    %v438 = vmul.f32 %v415, %v428
    %v439 = vmul.f32 %v416, %v428
    %v440 = vmul.f32 %v417, %v428
    %v441 = vmul.f32 %v418, %v428
    %v442 = vmul.f32 %v419, %v428
    %v443 = vmul.f32 %v420, %v428
    %v444 = vmul.f32 %v421, %v428
    %v445 = vmul.f32 %v422, %v428
    %v446 = vsub.f32 %v169, %v311
    %v447 = vsub.f32 %v172, %v312
    %v448 = vsub.f32 %v177, %v313
    %v449 = vsub.f32 %v180, %v314
    %v450 = vsub.f32 %v185, %v315
    %v451 = vsub.f32 %v188, %v316
    %v452 = vsub.f32 %v193, %v317
    %v453 = vsub.f32 %v196, %v318
    %v454 = vsub.f32 %v201, %v319
    %v455 = vsub.f32 %v204, %v320
    %v456 = vsub.f32 %v209, %v321
    %v457 = vsub.f32 %v212, %v322
    %v458 = vsub.f32 %v217, %v323
    %v459 = vsub.f32 %v220, %v324
    %v460 = vsub.f32 %v225, %v325
    %v461 = vsub.f32 %v228, %v326
    %v462 = vmul.f32 %v446, %v430
    %v463 = vmul.f32 %v447, %v431
    %v464 = vmul.f32 %v448, %v432
    %v465 = vmul.f32 %v449, %v433
    %v466 = vmul.f32 %v450, %v434
    %v467 = vmul.f32 %v451, %v435
    %v468 = vmul.f32 %v452, %v436
    %v469 = vmul.f32 %v453, %v437
    %v470 = vmul.f32 %v454, %v438
    %v471 = vmul.f32 %v455, %v439
    %v472 = vmul.f32 %v456, %v440
    %v473 = vmul.f32 %v457, %v441
    %v474 = vmul.f32 %v458, %v442
    %v475 = vmul.f32 %v459, %v443
    %v476 = vmul.f32 %v460, %v444
    %v477 = vmul.f32 %v461, %v445
    %v478 = vld [vmem:[%s4] sm:$0x1]
    %v480 = vlaneseq
    %v481 = vshrl.u32 %v480, 7
    %v482 = vsub.s32 0, %v481
    %v483 = vrot.slane %v478, %v482
    %v485 = vadd.f32 %v462, %v483
    %v486 = vadd.f32 %v463, %v483
    %v487 = vadd.f32 %v464, %v483
    %v488 = vadd.f32 %v465, %v483
    %v489 = vadd.f32 %v466, %v483
    %v490 = vadd.f32 %v467, %v483
    %v491 = vadd.f32 %v468, %v483
    %v492 = vadd.f32 %v469, %v483
    %v493 = vadd.f32 %v470, %v483
    %v494 = vadd.f32 %v471, %v483
    %v495 = vadd.f32 %v472, %v483
    %v496 = vadd.f32 %v473, %v483
    %v497 = vadd.f32 %v474, %v483
    %v498 = vadd.f32 %v475, %v483
    %v499 = vadd.f32 %v476, %v483
    %v500 = vadd.f32 %v477, %v483
    %v501 = vmax.f32 %v485, 0.0
    %v502 = vmax.f32 %v486, 0.0
    %v503 = vmax.f32 %v487, 0.0
    %v504 = vmax.f32 %v488, 0.0
    %v505 = vmax.f32 %v489, 0.0
    %v506 = vmax.f32 %v490, 0.0
    %v507 = vmax.f32 %v491, 0.0
    %v508 = vmax.f32 %v492, 0.0
    %v509 = vmax.f32 %v493, 0.0
    %v510 = vmax.f32 %v494, 0.0
    %v511 = vmax.f32 %v495, 0.0
    %v512 = vmax.f32 %v496, 0.0
    %v513 = vmax.f32 %v497, 0.0
    %v514 = vmax.f32 %v498, 0.0
    %v515 = vmax.f32 %v499, 0.0
    %v516 = vmax.f32 %v500, 0.0
    %517 = vst [vmem:[#allocation2] sm:$0xff] %v501
    %518 = vst [vmem:[#allocation2 + $0x8] sm:$0xff] %v502
    %519 = vst [vmem:[#allocation2 + $0x10] sm:$0xff] %v503
    %520 = vst [vmem:[#allocation2 + $0x18] sm:$0xff] %v504
    %521 = vst [vmem:[#allocation2 + $0x20] sm:$0xff] %v505
    %522 = vst [vmem:[#allocation2 + $0x28] sm:$0xff] %v506
    %523 = vst [vmem:[#allocation2 + $0x30] sm:$0xff] %v507
    %524 = vst [vmem:[#allocation2 + $0x38] sm:$0xff] %v508
    %525 = vst [vmem:[#allocation2 + $0x40] sm:$0xff] %v509
    %526 = vst [vmem:[#allocation2 + $0x48] sm:$0xff] %v510
    %527 = vst [vmem:[#allocation2 + $0x50] sm:$0xff] %v511
    %528 = vst [vmem:[#allocation2 + $0x58] sm:$0xff] %v512
    %529 = vst [vmem:[#allocation2 + $0x60] sm:$0xff] %v513
    %530 = vst [vmem:[#allocation2 + $0x68] sm:$0xff] %v514
    %531 = vst [vmem:[#allocation2 + $0x70] sm:$0xff] %v515
    %532 = vst [vmem:[#allocation2 + $0x78] sm:$0xff] %v516
    // Predicated region
    $region22: #{tpu_custom_call.1} parent=1 // pred_check
      _
    $region23: #{tpu_custom_call.1} parent=1 // pred_check_branch
      %534 = sbr.rel (0) target = $region25
    $region24: #{tpu_custom_call.1} parent=1 // pred_region
      %s536 = ssub.s32 2048, 2048
      %537 = vsyncadd [#allocation3], %s536
      %s538 = sshll.u32 [#allocation2], 4
      %s539 = int_to_ptr.vmem [resolvable:$true] %s538
      %544 = dma.vmem_to_hbm [thread:$0]  %s539, 2048, %s5, [#allocation3], 128, 128, 8
    $region25: #{tpu_custom_call.1} parent=1 // pred_fallthru
      _
    // Predicated region
    $region26: #{tpu_custom_call.1} parent=1 // pred_check
      _
    $region27: #{tpu_custom_call.1} parent=1 // pred_check_branch
      %546 = sbr.rel (0) target = $region29
    $region28: #{tpu_custom_call.1} parent=1 // pred_region
      %547 = dma.done [#allocation3], 2048
    $region29: #{tpu_custom_call.1} parent=1 // pred_fallthru
      _
    %548 = vsyncpa [#allocation3], 1

</llo_original>
